<compile_context>
chip_gen: v6e
topology: v6e:2x2x1
jax: 0.10.0
libtpu: 0.0.40
codegen_flags: <defaults>
</compile_context>

<pallas_src>
import functools

import jax
import jax.numpy as jnp
from jax.experimental import pallas as pl
from jax.experimental.pallas import tpu as pltpu


def _round_up(x, m):
    return ((x + m - 1) // m) * m


def _adv_loss_kernel(nx, ny, nxt, nyt, x_ref, y_ref, w_ref, bd_ref, out_ref):
    """Processes one audio row-tile and one video row-tile per grid step.

    x_ref, y_ref : (tm, D)     audio / video embedding tiles (native dtype)
    w_ref        : (D, 1)      folded discriminator direction (embedding dtype)
    bd_ref       : (1, 1) SMEM folded bias difference b_eff[1] - b_eff[0] (f32)
    out_ref      : (1, 8, 128) per-tile partials: [0,0,0]=loss sum, [0,0,1]=correct count
    """
    i = pl.program_id(0)
    tm = x_ref.shape[0]
    base = i * tm

    w = w_ref[...]                                     # (D, 1)
    bd = bd_ref[0, 0]                                  # scalar f32

    row = jax.lax.broadcasted_iota(jnp.int32, (tm, 1), 0) + base
    lane = jax.lax.broadcasted_iota(jnp.int32, (8, 128), 1)

    def tile_stats(v_ref, n_valid, is_audio):
        # d = logit1 - logit0 from a single folded (D, 1) projection.
        d = jnp.dot(v_ref[...], w, preferred_element_type=jnp.float32) + bd   # (tm, 1) f32
        # Binary cross-entropy closed form (stable softplus):
        #   label 1 (audio): CE = softplus(-d); label 0 (video): CE = softplus(d)
        z = -d if is_audio else d
        loss_i = jnp.maximum(z, 0.0) + jnp.log1p(jnp.exp(-jnp.abs(z)))
        # torch.argmax returns the first index on ties -> pred==1 iff d > 0.
        correct = (d > 0.0) if is_audio else (d <= 0.0)
        mask = row < n_valid                 # drop padded/clamped rows (select, not multiply)
        loss_sum = jnp.sum(jnp.where(mask, loss_i, 0.0))
        corr_sum = jnp.sum(jnp.where(mask & correct, 1.0, 0.0))
        return loss_sum, corr_sum

    def pack(loss_sum, corr_sum):
        return jnp.where(lane == 0, loss_sum,
                         jnp.where(lane == 1, corr_sum, 0.0))

    if nxt == nyt:
        # Common (balanced) case: both modalities have valid rows on every tile.
        lx, cx = tile_stats(x_ref, nx, True)       # audio rows, label 1
        ly, cy = tile_stats(y_ref, ny, False)      # video rows, label 0
        out_ref[0] = pack(lx + ly, cx + cy)
    else:
        # Unbalanced batches: skip the fully-masked modality's matmul/softplus
        # on tail tiles (its block index is clamped, so there is no extra DMA).
        out_ref[0] = jnp.zeros(out_ref.shape[1:], out_ref.dtype)

        @pl.when(i < nxt)
        def _():
            lx, cx = tile_stats(x_ref, nx, True)
            out_ref[0] = out_ref[0] + pack(lx, cx)

        @pl.when(i < nyt)
        def _():
            ly, cy = tile_stats(y_ref, ny, False)
            out_ref[0] = out_ref[0] + pack(ly, cy)


def fold_discriminator_params(params):
    """Fold the three activation-free Linear layers into one (D, 1) direction.

    Exact algebra (the torch discriminator has no nonlinearities). Only the
    logit difference d = logit1 - logit0 matters for 2-class CE and argmax,
    so the (D, 2) effective projection collapses to a single column plus a
    scalar bias difference. Call once, outside the per-step loss call.
    """
    w1, b1, w2, b2, w3, b3 = [jnp.asarray(p, jnp.float32) for p in params]
    w23 = w2.T @ w3.T                        # (D/2, 2)
    w_eff = w1.T @ w23                       # (D, 2)
    b_eff = b1 @ w23 + b2 @ w3.T + b3        # (2,)
    w_d = (w_eff[:, 1] - w_eff[:, 0]).reshape(-1, 1)   # (D, 1)
    b_d = (b_eff[1] - b_eff[0]).reshape(1, 1)          # (1, 1)
    return w_d, b_d


def adv_cross_modal_loss(x_embed, y_embed, folded_params, *,
                         tm=None,
                         target_step_bytes=4 << 20,     # embedding bytes streamed per grid step
                         input_vmem_budget=40 << 20,    # 2 inputs x 2 pipeline buffers
                         vmem_limit_bytes=48 << 20):    # v7x-safe; raise to ~96 MiB on v5e/v6e
    """x_embed: (Bx, D) audio embeddings; y_embed: (By, D) video embeddings."""
    w_d, b_d = folded_params
    nx, D = x_embed.shape
    ny, Dy = y_embed.shape
    assert D == Dy and w_d.shape == (D, 1) and b_d.shape == (1, 1)
    assert nx > 0 and ny > 0, "both modalities need at least one row"
    assert x_embed.dtype == y_embed.dtype

    itemsize = jnp.dtype(x_embed.dtype).itemsize
    if tm is None:
        # D-aware batch tile: big enough to amortize per-step pipeline overhead,
        # small enough that double-buffered inputs fit the VMEM budget.
        tm_target = max(1, target_step_bytes // (2 * D * itemsize))
        tm_cap = max(1, input_vmem_budget // (4 * D * itemsize))
        tm = _round_up(min(tm_target, tm_cap), 128)
    # Never larger than the (sublane-rounded) batch; sublane-aligned.
    tm = max(8, _round_up(min(tm, _round_up(max(nx, ny), 8)), 8))

    nxt = pl.cdiv(nx, tm)
    nyt = pl.cdiv(ny, tm)
    num_tiles = max(nxt, nyt)

    # Feed the MXU native-dtype operands (no in-kernel f32 upcast copy).
    w_d = w_d.astype(x_embed.dtype)
    b_d = b_d.astype(jnp.float32)

    parts = pl.pallas_call(
        functools.partial(_adv_loss_kernel, nx, ny, nxt, nyt),
        grid=(num_tiles,),
        in_specs=[
            # Clamp the block index for the shorter modality; extra rows masked in-kernel.
            pl.BlockSpec((tm, D), lambda i: (jnp.minimum(i, nxt - 1), 0)),
            pl.BlockSpec((tm, D), lambda i: (jnp.minimum(i, nyt - 1), 0)),
            pl.BlockSpec((D, 1), lambda i: (0, 0)),                        # folded direction
            pl.BlockSpec((1, 1), lambda i: (0, 0),
                         memory_space=pltpu.MemorySpace.SMEM),             # scalar bias diff
        ],
        out_specs=pl.BlockSpec((1, 8, 128), lambda i: (i, 0, 0)),
        out_shape=jax.ShapeDtypeStruct((num_tiles, 8, 128), jnp.float32),
        compiler_params=pltpu.CompilerParams(
            dimension_semantics=("parallel",),          # per-tile partials -> megacore-safe
            vmem_limit_bytes=vmem_limit_bytes,
        ),
    )(x_embed, y_embed, w_d, b_d)

    n_total = jnp.float32(nx + ny)
    loss = jnp.sum(parts[:, 0, 0]) / n_total
    acc = jnp.sum(parts[:, 0, 1]) / n_total
    return loss, acc


def init_params(key, data_dim):
    """Deterministic synthetic init matching the PyTorch module's shapes."""
    k1, k2, k3, kb1, kb2, kb3 = jax.random.split(key, 6)
    d2, d4 = data_dim // 2, data_dim // 4
    # weights ~ N(0, 0.01) as in torch.normal(0, 0.01, ...)
    w1 = 0.01 * jax.random.normal(k1, (d2, data_dim), jnp.float32)
    w2 = 0.01 * jax.random.normal(k2, (d4, d2), jnp.float32)
    w3 = 0.01 * jax.random.normal(k3, (2, d4), jnp.float32)
    # biases: nn.Linear default is U(-1/sqrt(fan_in), 1/sqrt(fan_in))
    b1 = jax.random.uniform(kb1, (d2,), jnp.float32,
                            -1.0 / data_dim ** 0.5, 1.0 / data_dim ** 0.5)
    b2 = jax.random.uniform(kb2, (d4,), jnp.float32,
                            -1.0 / d2 ** 0.5, 1.0 / d2 ** 0.5)
    b3 = jax.random.uniform(kb3, (2,), jnp.float32,
                            -1.0 / d4 ** 0.5, 1.0 / d4 ** 0.5)
    return (w1, b1, w2, b2, w3, b3)


def _reference(x_embed, y_embed, params):
    """Pure-JAX reference of the PyTorch forward for sanity checking."""
    w1, b1, w2, b2, w3, b3 = params

    def disc(v):
        h = v @ w1.T + b1
        h = h @ w2.T + b2
        return h @ w3.T + b3

    logits = jnp.concatenate([disc(x_embed), disc(y_embed)], axis=0)
    labels = jnp.concatenate([jnp.ones(x_embed.shape[0], jnp.int32),
                              jnp.zeros(y_embed.shape[0], jnp.int32)])
    lse = jax.nn.logsumexp(logits, axis=1)
    picked = jnp.take_along_axis(logits, labels[:, None], axis=1)[:, 0]
    loss = jnp.mean(lse - picked)
    acc = jnp.mean((jnp.argmax(logits, axis=1) == labels).astype(jnp.float32))
    return loss, acc


if __name__ == "__main__":
    key = jax.random.PRNGKey(0)
    kp, kx, ky, kp2, kx2, ky2 = jax.random.split(key, 6)

    # --- Test 1: small balanced batch (module-scale shapes, single tile) ---
    data_dim = 128
    bx, by = 8, 8
    params = init_params(kp, data_dim)
    x_embed = jax.random.normal(kx, (bx, data_dim), jnp.float32)
    y_embed = jax.random.normal(ky, (by, data_dim), jnp.float32)
    folded = fold_discriminator_params(params)

    loss, acc = jax.jit(adv_cross_modal_loss)(x_embed, y_embed, folded)
    loss, acc = jax.block_until_ready((loss, acc))
    ref_loss, ref_acc = _reference(x_embed, y_embed, params)
    assert jnp.allclose(loss, ref_loss, atol=1e-5, rtol=1e-5), (loss, ref_loss)
    assert jnp.allclose(acc, ref_acc, atol=1e-6), (acc, ref_acc)

    # --- Test 2: unbalanced multi-tile batch (exercises masking + pl.when gating) ---
    data_dim2 = 256
    nx2, ny2 = 300, 200
    params2 = init_params(kp2, data_dim2)
    x2 = jax.random.normal(kx2, (nx2, data_dim2), jnp.float32)
    y2 = jax.random.normal(ky2, (ny2, data_dim2), jnp.float32)
    folded2 = fold_discriminator_params(params2)

    loss2, acc2 = jax.jit(functools.partial(adv_cross_modal_loss, tm=128))(x2, y2, folded2)
    loss2, acc2 = jax.block_until_ready((loss2, acc2))
    ref_loss2, ref_acc2 = _reference(x2, y2, params2)
    assert jnp.allclose(loss2, ref_loss2, atol=1e-5, rtol=1e-4), (loss2, ref_loss2)
    assert jnp.allclose(acc2, ref_acc2, atol=1e-6), (acc2, ref_acc2)

    print("KERNEL_OK")
</pallas_src>

<mosaic_0001>
module attributes {stable_mosaic.version = 11 : i64} {
  func.func @_adv_loss_kernel(%arg0: i32, %arg1: memref<8x128xf32, #tpu.memory_space<vmem>>, %arg2: memref<8x128xf32, #tpu.memory_space<vmem>>, %arg3: memref<128x1xf32, #tpu.memory_space<vmem>>, %arg4: memref<1x1xf32, #tpu.memory_space<smem>>, %arg5: memref<1x8x128xf32, #tpu.memory_space<vmem>>) attributes {dimension_semantics = [#tpu.dimension_semantics<parallel>], iteration_bounds = array<i64: 1>, scalar_prefetch = 0 : i64, scratch_operands = 0 : i64, tpu.core_type = #tpu.core_type<tc>, window_params = [{transform_indices = @transform_0, window_bounds = array<i64: 8, 128>}, {transform_indices = @transform_1, window_bounds = array<i64: 8, 128>}, {pipeline_mode = #tpu.pipeline_mode<synchronous>, transform_indices = @transform_2, window_bounds = array<i64: 128, 1>}, {transform_indices = @transform_3, window_bounds = array<i64: 1, 1>}, {transform_indices = @transform_4, window_bounds = array<i64: 1, 8, 128>}]} {
    %c8_i32 = arith.constant 8 : i32
    %0 = arith.muli %arg0, %c8_i32 : i32
    %c0 = arith.constant 0 : index
    %c0_0 = arith.constant 0 : index
    %1 = vector.load %arg3[%c0, %c0_0] : memref<128x1xf32, #tpu.memory_space<vmem>>, vector<128x1xf32>
    %c0_1 = arith.constant 0 : index
    %c0_2 = arith.constant 0 : index
    %2 = memref.load %arg4[%c0_1, %c0_2] : memref<1x1xf32, #tpu.memory_space<smem>>
    %3 = tpu.iota {dimensions = array<i32: 0>} : vector<8x1xi32>
    %4 = vector.broadcast %0 : i32 to vector<8x1xi32>
    %5 = arith.addi %3, %4 : vector<8x1xi32>
    %6 = tpu.iota {dimensions = array<i32: 1>} : vector<8x128xi32>
    %c0_3 = arith.constant 0 : index
    %c0_4 = arith.constant 0 : index
    %7 = vector.load %arg1[%c0_3, %c0_4] : memref<8x128xf32, #tpu.memory_space<vmem>>, vector<8x128xf32>
    %cst = arith.constant dense<0.000000e+00> : vector<8x1xf32>
    %8 = tpu.matmul %7, %1, %cst {dimension_numbers = #tpu.dot_dimension_numbers<[1], [0], [0], [1], [0, 0, 1, 1], [], []>} : vector<8x128xf32>, vector<128x1xf32>, vector<8x1xf32> -> vector<8x1xf32>
    %9 = vector.broadcast %2 : f32 to vector<8x1xf32>
    %10 = arith.addf %8, %9 : vector<8x1xf32>
    %cst_5 = arith.constant 0.000000e+00 : f32
    %11 = vector.broadcast %cst_5 : f32 to vector<8x1xf32>
    %12 = arith.subf %11, %10 : vector<8x1xf32>
    %cst_6 = arith.constant 0.000000e+00 : f32
    %13 = vector.broadcast %cst_6 : f32 to vector<8x1xf32>
    %14 = arith.maximumf %12, %13 : vector<8x1xf32>
    %15 = math.absf %12 : vector<8x1xf32>
    %cst_7 = arith.constant 0.000000e+00 : f32
    %16 = vector.broadcast %cst_7 : f32 to vector<8x1xf32>
    %17 = arith.subf %16, %15 : vector<8x1xf32>
    %18 = math.exp %17 : vector<8x1xf32>
    %19 = math.log1p %18 : vector<8x1xf32>
    %20 = arith.addf %14, %19 : vector<8x1xf32>
    %cst_8 = arith.constant 0.000000e+00 : f32
    %21 = vector.broadcast %cst_8 : f32 to vector<8x1xf32>
    %22 = arith.cmpf ogt, %10, %21 : vector<8x1xf32>
    %c8_i32_9 = arith.constant 8 : i32
    %23 = vector.broadcast %c8_i32_9 : i32 to vector<8x1xi32>
    %24 = arith.cmpi slt, %5, %23 : vector<8x1xi32>
    %cst_10 = arith.constant 0.000000e+00 : f32
    %25 = vector.broadcast %cst_10 : f32 to vector<8x1xf32>
    %26 = arith.select %24, %20, %25 : vector<8x1xi1>, vector<8x1xf32>
    %27 = vector.shape_cast %26 : vector<8x1xf32> to vector<1x8x1xf32>
    %cst_11 = arith.constant dense<0.000000e+00> : vector<1xf32>
    %28 = vector.multi_reduction <add>, %27, %cst_11 [1, 2] : vector<1x8x1xf32> to vector<1xf32>
    %29 = vector.shape_cast %28 : vector<1xf32> to vector<1x1x1xf32>
    %30 = vector.extract %29[0, 0, 0] : f32 from vector<1x1x1xf32>
    %31 = arith.andi %24, %22 : vector<8x1xi1>
    %cst_12 = arith.constant 1.000000e+00 : f32
    %cst_13 = arith.constant 0.000000e+00 : f32
    %32 = vector.broadcast %cst_12 : f32 to vector<8x1xf32>
    %33 = vector.broadcast %cst_13 : f32 to vector<8x1xf32>
    %34 = arith.select %31, %32, %33 : vector<8x1xi1>, vector<8x1xf32>
    %35 = vector.shape_cast %34 : vector<8x1xf32> to vector<1x8x1xf32>
    %cst_14 = arith.constant dense<0.000000e+00> : vector<1xf32>
    %36 = vector.multi_reduction <add>, %35, %cst_14 [1, 2] : vector<1x8x1xf32> to vector<1xf32>
    %37 = vector.shape_cast %36 : vector<1xf32> to vector<1x1x1xf32>
    %38 = vector.extract %37[0, 0, 0] : f32 from vector<1x1x1xf32>
    %c0_15 = arith.constant 0 : index
    %c0_16 = arith.constant 0 : index
    %39 = vector.load %arg2[%c0_15, %c0_16] : memref<8x128xf32, #tpu.memory_space<vmem>>, vector<8x128xf32>
    %cst_17 = arith.constant dense<0.000000e+00> : vector<8x1xf32>
    %40 = tpu.matmul %39, %1, %cst_17 {dimension_numbers = #tpu.dot_dimension_numbers<[1], [0], [0], [1], [0, 0, 1, 1], [], []>} : vector<8x128xf32>, vector<128x1xf32>, vector<8x1xf32> -> vector<8x1xf32>
    %41 = vector.broadcast %2 : f32 to vector<8x1xf32>
    %42 = arith.addf %40, %41 : vector<8x1xf32>
    %cst_18 = arith.constant 0.000000e+00 : f32
    %43 = vector.broadcast %cst_18 : f32 to vector<8x1xf32>
    %44 = arith.maximumf %42, %43 : vector<8x1xf32>
    %45 = math.absf %42 : vector<8x1xf32>
    %cst_19 = arith.constant 0.000000e+00 : f32
    %46 = vector.broadcast %cst_19 : f32 to vector<8x1xf32>
    %47 = arith.subf %46, %45 : vector<8x1xf32>
    %48 = math.exp %47 : vector<8x1xf32>
    %49 = math.log1p %48 : vector<8x1xf32>
    %50 = arith.addf %44, %49 : vector<8x1xf32>
    %cst_20 = arith.constant 0.000000e+00 : f32
    %51 = vector.broadcast %cst_20 : f32 to vector<8x1xf32>
    %52 = arith.cmpf ole, %42, %51 : vector<8x1xf32>
    %c8_i32_21 = arith.constant 8 : i32
    %53 = vector.broadcast %c8_i32_21 : i32 to vector<8x1xi32>
    %54 = arith.cmpi slt, %5, %53 : vector<8x1xi32>
    %cst_22 = arith.constant 0.000000e+00 : f32
    %55 = vector.broadcast %cst_22 : f32 to vector<8x1xf32>
    %56 = arith.select %54, %50, %55 : vector<8x1xi1>, vector<8x1xf32>
    %57 = vector.shape_cast %56 : vector<8x1xf32> to vector<1x8x1xf32>
    %cst_23 = arith.constant dense<0.000000e+00> : vector<1xf32>
    %58 = vector.multi_reduction <add>, %57, %cst_23 [1, 2] : vector<1x8x1xf32> to vector<1xf32>
    %59 = vector.shape_cast %58 : vector<1xf32> to vector<1x1x1xf32>
    %60 = vector.extract %59[0, 0, 0] : f32 from vector<1x1x1xf32>
    %61 = arith.andi %54, %52 : vector<8x1xi1>
    %cst_24 = arith.constant 1.000000e+00 : f32
    %cst_25 = arith.constant 0.000000e+00 : f32
    %62 = vector.broadcast %cst_24 : f32 to vector<8x1xf32>
    %63 = vector.broadcast %cst_25 : f32 to vector<8x1xf32>
    %64 = arith.select %61, %62, %63 : vector<8x1xi1>, vector<8x1xf32>
    %65 = vector.shape_cast %64 : vector<8x1xf32> to vector<1x8x1xf32>
    %cst_26 = arith.constant dense<0.000000e+00> : vector<1xf32>
    %66 = vector.multi_reduction <add>, %65, %cst_26 [1, 2] : vector<1x8x1xf32> to vector<1xf32>
    %67 = vector.shape_cast %66 : vector<1xf32> to vector<1x1x1xf32>
    %68 = vector.extract %67[0, 0, 0] : f32 from vector<1x1x1xf32>
    %69 = arith.addf %30, %60 : f32
    %70 = arith.addf %38, %68 : f32
    %c0_i32 = arith.constant 0 : i32
    %71 = vector.broadcast %c0_i32 : i32 to vector<8x128xi32>
    %72 = arith.cmpi eq, %6, %71 : vector<8x128xi32>
    %c1_i32 = arith.constant 1 : i32
    %73 = vector.broadcast %c1_i32 : i32 to vector<8x128xi32>
    %74 = arith.cmpi eq, %6, %73 : vector<8x128xi32>
    %cst_27 = arith.constant 0.000000e+00 : f32
    %75 = vector.broadcast %70 : f32 to vector<8x128xf32>
    %76 = vector.broadcast %cst_27 : f32 to vector<8x128xf32>
    %77 = arith.select %74, %75, %76 : vector<8x128xi1>, vector<8x128xf32>
    %78 = vector.broadcast %69 : f32 to vector<8x128xf32>
    %79 = arith.select %72, %78, %77 : vector<8x128xi1>, vector<8x128xf32>
    %c0_28 = arith.constant 0 : index
    %c0_29 = arith.constant 0 : index
    %c0_30 = arith.constant 0 : index
    %80 = vector.load %arg5[%c0_28, %c0_29, %c0_30] : memref<1x8x128xf32, #tpu.memory_space<vmem>>, vector<1x8x128xf32>
    %81 = vector.shape_cast %80 : vector<1x8x128xf32> to vector<8x128xf32>
    %82 = vector.shape_cast %79 : vector<8x128xf32> to vector<1x8x128xf32>
    tpu.vector_store %arg5[%c0_28, %c0_29, %c0_30], %82 {strides = array<i32>} : memref<1x8x128xf32, #tpu.memory_space<vmem>>, vector<1x8x128xf32>,
    return
  }
  func.func @transform_0(%arg0: i32) -> (i32, i32) {
    %c0_i32 = arith.constant 0 : i32
    %0 = arith.minsi %arg0, %c0_i32 : i32
    %c0_i32_0 = arith.constant 0 : i32
    %c0_i32_1 = arith.constant 0 : i32
    return %0, %c0_i32_0 : i32, i32
  }
  func.func @transform_1(%arg0: i32) -> (i32, i32) {
    %c0_i32 = arith.constant 0 : i32
    %0 = arith.minsi %arg0, %c0_i32 : i32
    %c0_i32_0 = arith.constant 0 : i32
    %c0_i32_1 = arith.constant 0 : i32
    return %0, %c0_i32_0 : i32, i32
  }
  func.func @transform_2(%arg0: i32) -> (i32, i32) {
    %c0_i32 = arith.constant 0 : i32
    %c0_i32_0 = arith.constant 0 : i32
    %c0_i32_1 = arith.constant 0 : i32
    return %c0_i32, %c0_i32_0 : i32, i32
  }
  func.func @transform_3(%arg0: i32) -> (i32, i32) {
    %c0_i32 = arith.constant 0 : i32
    %c0_i32_0 = arith.constant 0 : i32
    %c0_i32_1 = arith.constant 0 : i32
    return %c0_i32, %c0_i32_0 : i32, i32
  }
  func.func @transform_4(%arg0: i32) -> (i32, i32, i32) {
    %c0_i32 = arith.constant 0 : i32
    %c0_i32_0 = arith.constant 0 : i32
    %c0_i32_1 = arith.constant 0 : i32
    return %arg0, %c0_i32, %c0_i32_0 : i32, i32, i32
  }
}

</mosaic_0001>

<llo_original>
// kernel: adv_cross_modal_loss.1
$region0: #{adv_cross_modal_loss.1}
  #allocation0 [shape = 'u32[]', space=smem, size = 0x4, offset = 0x4, fixed_abs, tag = 'smem constant byte address 0x4 - core index']
  #allocation1 [shape = 'u32[144,128]{1,0:T(1,128)}', space=vmem, size = 0x12000, scoped, tag = 'internal scratch']
  #allocation2 [shape = 'f32[1,1]{1,0:T(1,128)S(6)}', space=smem, size = 0x200, scoped, tag = 'scoped memory for adv_cross_modal_loss.1']
  %s0 = inlined_call_operand.vmem [shape: f32[8,128], index: 0, kind: input, shape index: {}]
  %s1 = inlined_call_operand.vmem [shape: f32[8,128], index: 1, kind: input, shape index: {}]
  %s2 = inlined_call_operand.vmem [shape: f32[128,1], index: 2, kind: input, shape index: {}]
  %s3 = inlined_call_operand.<no memory space> [shape: f32[1,1], index: 3, kind: input, shape index: {}]
  %s4 = inlined_call_operand.vmem [shape: f32[1,8,128], index: 4, kind: output, shape index: {}]
  %s5 = sld [smem:[#allocation0]]
  $region26: #{adv_cross_modal_loss.1} parent=0
    _
  %s7 = ssub.s32 1, %s5
  %s8 = scalar_select 0, %s7, %s5
  %9 = sst [smem:[#allocation2]] %s3
  // Predicated region
  $region2: #{adv_cross_modal_loss.1} parent=0 // pred_check
    _
  $region3: #{adv_cross_modal_loss.1} parent=0 // pred_check_branch
    %11 = sbr.rel (0) target = $region5
  $region4: #{adv_cross_modal_loss.1} parent=0 // pred_region
    _
  $region5: #{adv_cross_modal_loss.1} parent=0 // pred_fallthru
    _
  // Predicated region
  $region6: #{adv_cross_modal_loss.1} parent=0 // pred_check
    _
  $region7: #{adv_cross_modal_loss.1} parent=0 // pred_check_branch
    %13 = sbr.rel (0) target = $region9
  $region8: #{adv_cross_modal_loss.1} parent=0 // pred_region
    _
  $region9: #{adv_cross_modal_loss.1} parent=0 // pred_fallthru
    _
  // Predicated region
  $region10: #{adv_cross_modal_loss.1} parent=0 // pred_check
    _
  $region11: #{adv_cross_modal_loss.1} parent=0 // pred_check_branch
    %15 = sbr.rel (0) target = $region13
  $region12: #{adv_cross_modal_loss.1} parent=0 // pred_region
    _
  $region13: #{adv_cross_modal_loss.1} parent=0 // pred_fallthru
    _
  // Predicated region
  $region14: #{adv_cross_modal_loss.1} parent=0 // pred_check
    _
  $region15: #{adv_cross_modal_loss.1} parent=0 // pred_check_branch
    %17 = sbr.rel (0) target = $region17
  $region16: #{adv_cross_modal_loss.1} parent=0 // pred_region
    _
  $region17: #{adv_cross_modal_loss.1} parent=0 // pred_fallthru
    _
  %s18 = smul.u32 0, 8
  %v19 = vld [vmem:[%s2] sm:$0xff]
  %v20 = vld [vmem:[%s2 + $0x8] sm:$0xff]
  %v21 = vld [vmem:[%s2 + $0x10] sm:$0xff]
  %v22 = vld [vmem:[%s2 + $0x18] sm:$0xff]
  %v23 = vld [vmem:[%s2 + $0x20] sm:$0xff]
  %v24 = vld [vmem:[%s2 + $0x28] sm:$0xff]
  %v25 = vld [vmem:[%s2 + $0x30] sm:$0xff]
  %v26 = vld [vmem:[%s2 + $0x38] sm:$0xff]
  %v27 = vld [vmem:[%s2 + $0x40] sm:$0xff]
  %v28 = vld [vmem:[%s2 + $0x48] sm:$0xff]
  %v29 = vld [vmem:[%s2 + $0x50] sm:$0xff]
  %v30 = vld [vmem:[%s2 + $0x58] sm:$0xff]
  %v31 = vld [vmem:[%s2 + $0x60] sm:$0xff]
  %v32 = vld [vmem:[%s2 + $0x68] sm:$0xff]
  %v33 = vld [vmem:[%s2 + $0x70] sm:$0xff]
  %v34 = vld [vmem:[%s2 + $0x78] sm:$0xff]
  %s35 = sld [smem:[#allocation2]]
  %v36 = vlaneseq
  %v37 = vshrl.u32 %v36, 7
  %v38 = vstv %s18
  %v39 = vadd.s32 %v37, %v38
  %v40 = vlaneseq
  %v41 = vand.u32 %v40, 127
  %v42 = vld [vmem:[%s0] sm:$0xff]
  %v43 = vstv %s35
  %44 = vmatprep.subr.mxu0 0.0
  %45 = vmatpush1.msra.mxu0 %v34
  %46 = vmatprep.subr.mxu0 0.0
  %47 = vmatpush1.msra.mxu0 %v33
  %48 = vmatprep.subr.mxu0 0.0
  %49 = vmatpush1.msra.mxu0 %v32
  %50 = vmatprep.subr.mxu0 0.0
  %51 = vmatpush1.msra.mxu0 %v31
  %52 = vmatprep.subr.mxu0 0.0
  %53 = vmatpush1.msra.mxu0 %v30
  %54 = vmatprep.subr.mxu0 0.0
  %55 = vmatpush1.msra.mxu0 %v29
  %56 = vmatprep.subr.mxu0 0.0
  %57 = vmatpush1.msra.mxu0 %v28
  %58 = vmatprep.subr.mxu0 0.0
  %59 = vmatpush1.msra.mxu0 %v27
  %60 = vmatprep.subr.mxu0 0.0
  %61 = vmatpush1.msra.mxu0 %v26
  %62 = vmatprep.subr.mxu0 0.0
  %63 = vmatpush1.msra.mxu0 %v25
  %64 = vmatprep.subr.mxu0 0.0
  %65 = vmatpush1.msra.mxu0 %v24
  %66 = vmatprep.subr.mxu0 0.0
  %67 = vmatpush1.msra.mxu0 %v23
  %68 = vmatprep.subr.mxu0 0.0
  %69 = vmatpush1.msra.mxu0 %v22
  %70 = vmatprep.subr.mxu0 0.0
  %71 = vmatpush1.msra.mxu0 %v21
  %72 = vmatprep.subr.mxu0 0.0
  %73 = vmatpush1.msra.mxu0 %v20
  %74 = vmatprep.subr.mxu0 0.0
  %75 = vmatpush1.msra.mxu0 %v19
  %76 = vmatprep.subr.mxu0 0.0
  %77 = vmatpush2.msra.mxu0 0.0
  %78 = vmatprep.subr.mxu0 0.0
  %79 = vmatpush2.msra.mxu0 0.0
  %80 = vmatprep.subr.mxu0 0.0
  %81 = vmatpush2.msra.mxu0 0.0
  %82 = vmatprep.subr.mxu0 0.0
  %83 = vmatpush2.msra.mxu0 0.0
  %84 = vmatprep.subr.mxu0 0.0
  %85 = vmatpush2.msra.mxu0 0.0
  %86 = vmatprep.subr.mxu0 0.0
  %87 = vmatpush2.msra.mxu0 0.0
  %88 = vmatprep.subr.mxu0 0.0
  %89 = vmatpush2.msra.mxu0 0.0
  %90 = vmatprep.subr.mxu0 0.0
  %91 = vmatpush2.msra.mxu0 0.0
  %92 = vmatprep.subr.mxu0 0.0
  %93 = vmatpush2.msra.mxu0 0.0
  %94 = vmatprep.subr.mxu0 0.0
  %95 = vmatpush2.msra.mxu0 0.0
  %96 = vmatprep.subr.mxu0 0.0
  %97 = vmatpush2.msra.mxu0 0.0
  %98 = vmatprep.subr.mxu0 0.0
  %99 = vmatpush2.msra.mxu0 0.0
  %100 = vmatprep.subr.mxu0 0.0
  %101 = vmatpush2.msra.mxu0 0.0
  %102 = vmatprep.subr.mxu0 0.0
  %103 = vmatpush2.msra.mxu0 0.0
  %104 = vmatprep.subr.mxu0 0.0
  %105 = vmatpush2.msra.mxu0 0.0
  %106 = vmatprep.subr.mxu0 0.0
  %107 = vmatpush2.msra.mxu0 0.0
  %108 = vmatprep.mubr.f32.mxu0 0.0
  %109 = vmatmul.mubr.f32.gmra.mxu0 %v42
  %v110 = vpop.f32.mrf.mxu0
  %v111 = vadd.f32 %v43, %v110
  %v112 = vpop.f32.mrf.mxu0
  %113 = vdwg.mxu0
  %v114 = vsub.f32 0.0, %v111
  %v115 = vmax.f32 %v114, 0.0
  %v116 = vand.u32 2147483647, %v114
  %v117 = vsub.f32 0.0, %v116
  %v118 = vmul.f32 %v117, 1.442695
  %v119 = vpow.pop %v118
  %v120 = vadd.f32 %v119, 1.0
  %v121 = vlog2.pop %v120
  %v122 = vmul.f32 %v121, 0.6931472
  %v123 = vmul.f32 -0.5, %v119
  %v124 = vadd.f32 %v123, 1.0
  %v125 = vmul.f32 %v124, %v119
  %v126 = vand.u32 2147483647, %v119
  %vm127 = vcmp.lt.f32.partialorder %v126, 0.0004427343
  %v128 = vsel %vm127, %v125, %v122
  %v129 = vadd.f32 %v115, %v128
  %vm130 = vcmp.gt.f32.partialorder %v111, 0.0
  %vm131 = vcmp.lt.s32.totalorder %v39, 8
  %v132 = vsel %vm131, %v129, 0.0
  %vm133 = vcmask 7168
  %v134 = vsel %vm133, %v132, 0.0
  %135 = vadd.xlane.f32.xlu0 %v134
  %v136 = vpop.xlane.xlu0 %135
  %v137 = vrot.slane %v136, 4
  %v138 = vadd.f32 %v136, %v137
  %v139 = vrot.slane %v138, 2
  %v140 = vadd.f32 %v138, %v139
  %v141 = vrot.slane %v140, 1
  %v142 = vadd.f32 %v140, %v141
  %s143 = vtos %v142
  %vm144 = vmand %vm131, %vm130
  %v145 = vsel %vm144, 1.0, 0.0
  %v146 = vsel %vm133, %v145, 0.0
  %147 = vadd.xlane.f32.xlu0 %v146
  %v148 = vpop.xlane.xlu0 %147
  %v149 = vrot.slane %v148, 4
  %v150 = vadd.f32 %v148, %v149
  %v151 = vrot.slane %v150, 2
  %v152 = vadd.f32 %v150, %v151
  %v153 = vrot.slane %v152, 1
  %v154 = vadd.f32 %v152, %v153
  %s155 = vtos %v154
  %v156 = vld [vmem:[%s1] sm:$0xff]
  %157 = vmatprep.subr.mxu0 0.0
  %158 = vmatpush1.msra.mxu0 %v34
  %159 = vmatprep.subr.mxu0 0.0
  %160 = vmatpush1.msra.mxu0 %v33
  %161 = vmatprep.subr.mxu0 0.0
  %162 = vmatpush1.msra.mxu0 %v32
  %163 = vmatprep.subr.mxu0 0.0
  %164 = vmatpush1.msra.mxu0 %v31
  %165 = vmatprep.subr.mxu0 0.0
  %166 = vmatpush1.msra.mxu0 %v30
  %167 = vmatprep.subr.mxu0 0.0
  %168 = vmatpush1.msra.mxu0 %v29
  %169 = vmatprep.subr.mxu0 0.0
  %170 = vmatpush1.msra.mxu0 %v28
  %171 = vmatprep.subr.mxu0 0.0
  %172 = vmatpush1.msra.mxu0 %v27
  %173 = vmatprep.subr.mxu0 0.0
  %174 = vmatpush1.msra.mxu0 %v26
  %175 = vmatprep.subr.mxu0 0.0
  %176 = vmatpush1.msra.mxu0 %v25
  %177 = vmatprep.subr.mxu0 0.0
  %178 = vmatpush1.msra.mxu0 %v24
  %179 = vmatprep.subr.mxu0 0.0
  %180 = vmatpush1.msra.mxu0 %v23
  %181 = vmatprep.subr.mxu0 0.0
  %182 = vmatpush1.msra.mxu0 %v22
  %183 = vmatprep.subr.mxu0 0.0
  %184 = vmatpush1.msra.mxu0 %v21
  %185 = vmatprep.subr.mxu0 0.0
  %186 = vmatpush1.msra.mxu0 %v20
  %187 = vmatprep.subr.mxu0 0.0
  %188 = vmatpush1.msra.mxu0 %v19
  %189 = vmatprep.subr.mxu0 0.0
  %190 = vmatpush2.msra.mxu0 0.0
  %191 = vmatprep.subr.mxu0 0.0
  %192 = vmatpush2.msra.mxu0 0.0
  %193 = vmatprep.subr.mxu0 0.0
  %194 = vmatpush2.msra.mxu0 0.0
  %195 = vmatprep.subr.mxu0 0.0
  %196 = vmatpush2.msra.mxu0 0.0
  %197 = vmatprep.subr.mxu0 0.0
  %198 = vmatpush2.msra.mxu0 0.0
  %199 = vmatprep.subr.mxu0 0.0
  %200 = vmatpush2.msra.mxu0 0.0
  %201 = vmatprep.subr.mxu0 0.0
  %202 = vmatpush2.msra.mxu0 0.0
  %203 = vmatprep.subr.mxu0 0.0
  %204 = vmatpush2.msra.mxu0 0.0
  %205 = vmatprep.subr.mxu0 0.0
  %206 = vmatpush2.msra.mxu0 0.0
  %207 = vmatprep.subr.mxu0 0.0
  %208 = vmatpush2.msra.mxu0 0.0
  %209 = vmatprep.subr.mxu0 0.0
  %210 = vmatpush2.msra.mxu0 0.0
  %211 = vmatprep.subr.mxu0 0.0
  %212 = vmatpush2.msra.mxu0 0.0
  %213 = vmatprep.subr.mxu0 0.0
  %214 = vmatpush2.msra.mxu0 0.0
  %215 = vmatprep.subr.mxu0 0.0
  %216 = vmatpush2.msra.mxu0 0.0
  %217 = vmatprep.subr.mxu0 0.0
  %218 = vmatpush2.msra.mxu0 0.0
  %219 = vmatprep.subr.mxu0 0.0
  %220 = vmatpush2.msra.mxu0 0.0
  %221 = vmatprep.mubr.f32.mxu0 0.0
  %222 = vmatmul.mubr.f32.gmra.mxu0 %v156
  %v223 = vpop.f32.mrf.mxu0
  %v224 = vadd.f32 %v43, %v223
  %v225 = vpop.f32.mrf.mxu0
  %226 = vdwg.mxu0
  %v227 = vmax.f32 %v224, 0.0
  %v228 = vand.u32 2147483647, %v224
  %v229 = vsub.f32 0.0, %v228
  %v230 = vmul.f32 %v229, 1.442695
  %v231 = vpow.pop %v230
  %v232 = vadd.f32 %v231, 1.0
  %v233 = vlog2.pop %v232
  %v234 = vmul.f32 %v233, 0.6931472
  %v235 = vmul.f32 -0.5, %v231
  %v236 = vadd.f32 %v235, 1.0
  %v237 = vmul.f32 %v236, %v231
  %v238 = vand.u32 2147483647, %v231
  %vm239 = vcmp.lt.f32.partialorder %v238, 0.0004427343
  %v240 = vsel %vm239, %v237, %v234
  %v241 = vadd.f32 %v227, %v240
  %vm242 = vcmp.le.f32.partialorder %v224, 0.0
  %v243 = vsel %vm131, %v241, 0.0
  %v244 = vsel %vm133, %v243, 0.0
  %245 = vadd.xlane.f32.xlu0 %v244
  %v246 = vpop.xlane.xlu0 %245
  %v247 = vrot.slane %v246, 4
  %v248 = vadd.f32 %v246, %v247
  %v249 = vrot.slane %v248, 2
  %v250 = vadd.f32 %v248, %v249
  %v251 = vrot.slane %v250, 1
  %v252 = vadd.f32 %v250, %v251
  %s253 = vtos %v252
  %vm254 = vmand %vm131, %vm242
  %v255 = vsel %vm254, 1.0, 0.0
  %v256 = vsel %vm133, %v255, 0.0
  %257 = vadd.xlane.f32.xlu0 %v256
  %v258 = vpop.xlane.xlu0 %257
  %v259 = vrot.slane %v258, 4
  %v260 = vadd.f32 %v258, %v259
  %v261 = vrot.slane %v260, 2
  %v262 = vadd.f32 %v260, %v261
  %v263 = vrot.slane %v262, 1
  %v264 = vadd.f32 %v262, %v263
  %s265 = vtos %v264
  %s266 = sadd.f32 %s143, %s253
  %s267 = sadd.f32 %s155, %s265
  %vm268 = vcmp.eq.s32.totalorder %v41, 0
  %vm269 = vcmp.eq.s32.totalorder %v41, 1
  %v270 = vstv %s267
  %v271 = vsel %vm269, %v270, 0.0
  %v272 = vstv %s266
  %v273 = vsel %vm268, %v272, %v271
  %274 = vst [vmem:[%s4] sm:$0xff] %v273
  // Predicated region
  $region18: #{adv_cross_modal_loss.1} parent=0 // pred_check
    _
  $region19: #{adv_cross_modal_loss.1} parent=0 // pred_check_branch
    %276 = sbr.rel (0) target = $region21
  $region20: #{adv_cross_modal_loss.1} parent=0 // pred_region
    _
  $region21: #{adv_cross_modal_loss.1} parent=0 // pred_fallthru
    _
  // Predicated region
  $region22: #{adv_cross_modal_loss.1} parent=0 // pred_check
    _
  $region23: #{adv_cross_modal_loss.1} parent=0 // pred_check_branch
    %278 = sbr.rel (0) target = $region25
  $region24: #{adv_cross_modal_loss.1} parent=0 // pred_region
    _
  $region25: #{adv_cross_modal_loss.1} parent=0 // pred_fallthru
    _

</llo_original>
